<compile_context>
chip_gen: v5e
topology: v5e:2x2
jax: 0.10.0
libtpu: 0.0.40
codegen_flags: <defaults>
</compile_context>

<pallas_src>
import functools

import jax
import jax.numpy as jnp
from jax.experimental import pallas as pl
from jax.experimental.pallas import tpu as pltpu

# Module hyper-parameters (from the PyTorch spec / globals).
LEN_SEQ = 16
N_CATEGORIES = 25
N_HIDDEN = 128
DECIM_RATIO = 1
N_LATENT = 64          # chosen so 2*n_latent = 128 -> lane-dense fused head
N_LAYER = 1


def _round_up(x, m):
    return ((x + m - 1) // m) * m


def _vae_encoder_mlp_kernel(x_ref, w1_ref, b1_ref, w2s_ref, b2s_ref,
                            w3_ref, b3_ref, o_ref, *, n_layer):
    # fc1 + ReLU  (MXU matmul, f32 accumulate; bias + relu on the VPU).
    h = jnp.dot(x_ref[...], w1_ref[...], preferred_element_type=jnp.float32)
    h = jnp.maximum(h + b1_ref[...], 0.0)

    # Hidden layers. Dropout is identity in eval mode.
    # TODO(synk): training-mode dropout (stochastic masking) not implemented.
    for j in range(n_layer):  # static unroll (n_layer is a Python int)
        h = jnp.dot(h, w2s_ref[j], preferred_element_type=jnp.float32)
        h = jnp.maximum(h + b2s_ref[j], 0.0)

    # fc31 / fc32 fused into one (H, 2*n_latent) matmul -> lane-dense output.
    out = jnp.dot(h, w3_ref[...], preferred_element_type=jnp.float32) + b3_ref[...]
    o_ref[...] = out.astype(o_ref.dtype)


def vae_encoder_mlp_forward(x, params, *, lenSeq=LEN_SEQ,
                            n_categories=N_CATEGORIES,
                            decimRatio=DECIM_RATIO, n_layer=N_LAYER,
                            tm_max=256):
    """Equivalent of VAEEncoderMLP.forward(x) -> (x1, x2) in eval mode."""
    w1, b1, w2s, b2s, w3, b3 = params
    K = int(lenSeq * n_categories / decimRatio)
    H = w1.shape[1]
    two_latent = w3.shape[1]
    n_latent = two_latent // 2

    # x.view(-1, K): metadata-only reshape -> no copy kernel.
    x2d = jnp.reshape(x, (-1, K))
    M = x2d.shape[0]

    # Row tiling: sublane-aligned (multiple of 8), capped; zero-pad batch so
    # the grid divides evenly (padded rows are sliced off afterwards).
    tm = min(_round_up(M, 8), tm_max)
    m_pad = _round_up(M, tm)
    if m_pad != M:
        x2d = jnp.pad(x2d, ((0, m_pad - M), (0, 0)))

    kernel = functools.partial(_vae_encoder_mlp_kernel, n_layer=n_layer)

    out = pl.pallas_call(
        kernel,
        out_shape=jax.ShapeDtypeStruct((m_pad, two_latent), x2d.dtype),
        grid_spec=pltpu.PrefetchScalarGridSpec(
            num_scalar_prefetch=0,
            grid=(m_pad // tm,),
            in_specs=[
                pl.BlockSpec((tm, K), lambda i: (i, 0)),              # x tile
                pl.BlockSpec((K, H), lambda i: (0, 0)),               # W1 (resident)
                pl.BlockSpec((1, H), lambda i: (0, 0)),               # b1
                pl.BlockSpec((n_layer, H, H), lambda i: (0, 0, 0)),   # W2 stack
                pl.BlockSpec((n_layer, 1, H), lambda i: (0, 0, 0)),   # b2 stack
                pl.BlockSpec((H, two_latent), lambda i: (0, 0)),      # [W31|W32]
                pl.BlockSpec((1, two_latent), lambda i: (0, 0)),      # [b31|b32]
            ],
            out_specs=pl.BlockSpec((tm, two_latent), lambda i: (i, 0)),
        ),
        compiler_params=pltpu.CompilerParams(
            dimension_semantics=("parallel",)),
    )(x2d, w1, b1, w2s, b2s, w3, b3)

    out = out[:M]
    return out[:, :n_latent], out[:, n_latent:]


def init_params(key, K, H, n_latent, n_layer, dtype=jnp.float32):
    """Deterministic params (PyTorch-like uniform init). Returns kernel params
    plus the unfused fc31/fc32 weights for the pure-JAX reference."""
    ks = jax.random.split(key, 8)
    s1 = 1.0 / float(K) ** 0.5
    s2 = 1.0 / float(H) ** 0.5
    w1 = jax.random.uniform(ks[0], (K, H), dtype, -s1, s1)
    b1 = jax.random.uniform(ks[1], (1, H), dtype, -s1, s1)
    w2s = jax.random.uniform(ks[2], (n_layer, H, H), dtype, -s2, s2)
    b2s = jax.random.uniform(ks[3], (n_layer, 1, H), dtype, -s2, s2)
    w31 = jax.random.uniform(ks[4], (H, n_latent), dtype, -s2, s2)
    b31 = jax.random.uniform(ks[5], (1, n_latent), dtype, -s2, s2)
    w32 = jax.random.uniform(ks[6], (H, n_latent), dtype, -s2, s2)
    b32 = jax.random.uniform(ks[7], (1, n_latent), dtype, -s2, s2)
    w3 = jnp.concatenate([w31, w32], axis=1)
    b3 = jnp.concatenate([b31, b32], axis=1)
    return (w1, b1, w2s, b2s, w3, b3), (w31, b31, w32, b32)


def reference_forward(x, params, heads, K, n_layer):
    w1, b1, w2s, b2s, _, _ = params
    w31, b31, w32, b32 = heads
    h = jnp.reshape(x, (-1, K))
    h = jnp.maximum(h @ w1 + b1, 0.0)
    for j in range(n_layer):
        h = jnp.maximum(h @ w2s[j] + b2s[j], 0.0)  # eval-mode dropout = identity
    return h @ w31 + b31, h @ w32 + b32


if __name__ == "__main__":
    key = jax.random.PRNGKey(0)
    k_param, k_x = jax.random.split(key)

    K = int(LEN_SEQ * N_CATEGORIES / DECIM_RATIO)  # 400
    params, heads = init_params(k_param, K, N_HIDDEN, N_LATENT, N_LAYER)

    # Small input consistent with the forward's flatten: (batch=2, 16, 25).
    x = jax.random.normal(k_x, (2, LEN_SEQ, N_CATEGORIES), dtype=jnp.float32)

    x1, x2 = vae_encoder_mlp_forward(x, params)
    x1 = jax.block_until_ready(x1)
    x2 = jax.block_until_ready(x2)

    r1, r2 = reference_forward(x, params, heads, K, N_LAYER)
    assert x1.shape == (2, N_LATENT) and x2.shape == (2, N_LATENT), (x1.shape, x2.shape)
    assert jnp.allclose(x1, r1, rtol=1e-5, atol=1e-5), "x1 mismatch vs reference"
    assert jnp.allclose(x2, r2, rtol=1e-5, atol=1e-5), "x2 mismatch vs reference"

    print("KERNEL_OK")
</pallas_src>

<mosaic_0001>
module attributes {stable_mosaic.version = 11 : i64} {
  func.func @_vae_encoder_mlp_kernel(%arg0: i32, %arg1: memref<8x400xf32, #tpu.memory_space<vmem>>, %arg2: memref<400x128xf32, #tpu.memory_space<vmem>>, %arg3: memref<1x128xf32, #tpu.memory_space<vmem>>, %arg4: memref<1x128x128xf32, #tpu.memory_space<vmem>>, %arg5: memref<1x1x128xf32, #tpu.memory_space<vmem>>, %arg6: memref<128x128xf32, #tpu.memory_space<vmem>>, %arg7: memref<1x128xf32, #tpu.memory_space<vmem>>, %arg8: memref<8x128xf32, #tpu.memory_space<vmem>>) attributes {dimension_semantics = [#tpu.dimension_semantics<parallel>], iteration_bounds = array<i64: 1>, scalar_prefetch = 0 : i64, scratch_operands = 0 : i64, tpu.core_type = #tpu.core_type<tc>, window_params = [{transform_indices = @transform_0, window_bounds = array<i64: 8, 400>}, {pipeline_mode = #tpu.pipeline_mode<synchronous>, transform_indices = @transform_1, window_bounds = array<i64: 400, 128>}, {pipeline_mode = #tpu.pipeline_mode<synchronous>, transform_indices = @transform_2, window_bounds = array<i64: 1, 128>}, {pipeline_mode = #tpu.pipeline_mode<synchronous>, transform_indices = @transform_3, window_bounds = array<i64: 1, 128, 128>}, {pipeline_mode = #tpu.pipeline_mode<synchronous>, transform_indices = @transform_4, window_bounds = array<i64: 1, 1, 128>}, {pipeline_mode = #tpu.pipeline_mode<synchronous>, transform_indices = @transform_5, window_bounds = array<i64: 128, 128>}, {pipeline_mode = #tpu.pipeline_mode<synchronous>, transform_indices = @transform_6, window_bounds = array<i64: 1, 128>}, {transform_indices = @transform_7, window_bounds = array<i64: 8, 128>}]} {
    %c0 = arith.constant 0 : index
    %c0_0 = arith.constant 0 : index
    %0 = vector.load %arg1[%c0, %c0_0] : memref<8x400xf32, #tpu.memory_space<vmem>>, vector<8x400xf32>
    %c0_1 = arith.constant 0 : index
    %c0_2 = arith.constant 0 : index
    %1 = vector.load %arg2[%c0_1, %c0_2] : memref<400x128xf32, #tpu.memory_space<vmem>>, vector<400x128xf32>
    %cst = arith.constant dense<0.000000e+00> : vector<8x128xf32>
    %2 = tpu.matmul %0, %1, %cst {dimension_numbers = #tpu.dot_dimension_numbers<[1], [0], [0], [1], [0, 0, 1, 1], [], []>} : vector<8x400xf32>, vector<400x128xf32>, vector<8x128xf32> -> vector<8x128xf32>
    %c0_3 = arith.constant 0 : index
    %c0_4 = arith.constant 0 : index
    %3 = vector.load %arg3[%c0_3, %c0_4] : memref<1x128xf32, #tpu.memory_space<vmem>>, vector<1x128xf32>
    %4 = vector.broadcast %3 : vector<1x128xf32> to vector<8x128xf32>
    %5 = arith.addf %2, %4 : vector<8x128xf32>
    %cst_5 = arith.constant 0.000000e+00 : f32
    %6 = vector.broadcast %cst_5 : f32 to vector<8x128xf32>
    %7 = arith.maximumf %5, %6 : vector<8x128xf32>
    %c0_6 = arith.constant 0 : index
    %c0_7 = arith.constant 0 : index
    %c0_8 = arith.constant 0 : index
    %8 = vector.load %arg4[%c0_6, %c0_7, %c0_8] : memref<1x128x128xf32, #tpu.memory_space<vmem>>, vector<1x128x128xf32>
    %9 = vector.shape_cast %8 : vector<1x128x128xf32> to vector<128x128xf32>
    %cst_9 = arith.constant dense<0.000000e+00> : vector<8x128xf32>
    %10 = tpu.matmul %7, %9, %cst_9 {dimension_numbers = #tpu.dot_dimension_numbers<[1], [0], [0], [1], [0, 0, 1, 1], [], []>} : vector<8x128xf32>, vector<128x128xf32>, vector<8x128xf32> -> vector<8x128xf32>
    %c0_10 = arith.constant 0 : index
    %c0_11 = arith.constant 0 : index
    %c0_12 = arith.constant 0 : index
    %11 = vector.load %arg5[%c0_10, %c0_11, %c0_12] : memref<1x1x128xf32, #tpu.memory_space<vmem>>, vector<1x1x128xf32>
    %12 = vector.shape_cast %11 : vector<1x1x128xf32> to vector<1x128xf32>
    %13 = vector.broadcast %12 : vector<1x128xf32> to vector<8x128xf32>
    %14 = arith.addf %10, %13 : vector<8x128xf32>
    %cst_13 = arith.constant 0.000000e+00 : f32
    %15 = vector.broadcast %cst_13 : f32 to vector<8x128xf32>
    %16 = arith.maximumf %14, %15 : vector<8x128xf32>
    %c0_14 = arith.constant 0 : index
    %c0_15 = arith.constant 0 : index
    %17 = vector.load %arg6[%c0_14, %c0_15] : memref<128x128xf32, #tpu.memory_space<vmem>>, vector<128x128xf32>
    %cst_16 = arith.constant dense<0.000000e+00> : vector<8x128xf32>
    %18 = tpu.matmul %16, %17, %cst_16 {dimension_numbers = #tpu.dot_dimension_numbers<[1], [0], [0], [1], [0, 0, 1, 1], [], []>} : vector<8x128xf32>, vector<128x128xf32>, vector<8x128xf32> -> vector<8x128xf32>
    %c0_17 = arith.constant 0 : index
    %c0_18 = arith.constant 0 : index
    %19 = vector.load %arg7[%c0_17, %c0_18] : memref<1x128xf32, #tpu.memory_space<vmem>>, vector<1x128xf32>
    %20 = vector.broadcast %19 : vector<1x128xf32> to vector<8x128xf32>
    %21 = arith.addf %18, %20 : vector<8x128xf32>
    %c0_19 = arith.constant 0 : index
    %c0_20 = arith.constant 0 : index
    %22 = vector.load %arg8[%c0_19, %c0_20] : memref<8x128xf32, #tpu.memory_space<vmem>>, vector<8x128xf32>
    tpu.vector_store %arg8[%c0_19, %c0_20], %21 {strides = array<i32>} : memref<8x128xf32, #tpu.memory_space<vmem>>, vector<8x128xf32>,
    return
  }
  func.func @transform_0(%arg0: i32) -> (i32, i32) {
    %c0_i32 = arith.constant 0 : i32
    %c0_i32_0 = arith.constant 0 : i32
    return %arg0, %c0_i32 : i32, i32
  }
  func.func @transform_1(%arg0: i32) -> (i32, i32) {
    %c0_i32 = arith.constant 0 : i32
    %c0_i32_0 = arith.constant 0 : i32
    %c0_i32_1 = arith.constant 0 : i32
    return %c0_i32, %c0_i32_0 : i32, i32
  }
  func.func @transform_2(%arg0: i32) -> (i32, i32) {
    %c0_i32 = arith.constant 0 : i32
    %c0_i32_0 = arith.constant 0 : i32
    %c0_i32_1 = arith.constant 0 : i32
    return %c0_i32, %c0_i32_0 : i32, i32
  }
  func.func @transform_3(%arg0: i32) -> (i32, i32, i32) {
    %c0_i32 = arith.constant 0 : i32
    %c0_i32_0 = arith.constant 0 : i32
    %c0_i32_1 = arith.constant 0 : i32
    %c0_i32_2 = arith.constant 0 : i32
    return %c0_i32, %c0_i32_0, %c0_i32_1 : i32, i32, i32
  }
  func.func @transform_4(%arg0: i32) -> (i32, i32, i32) {
    %c0_i32 = arith.constant 0 : i32
    %c0_i32_0 = arith.constant 0 : i32
    %c0_i32_1 = arith.constant 0 : i32
    %c0_i32_2 = arith.constant 0 : i32
    return %c0_i32, %c0_i32_0, %c0_i32_1 : i32, i32, i32
  }
  func.func @transform_5(%arg0: i32) -> (i32, i32) {
    %c0_i32 = arith.constant 0 : i32
    %c0_i32_0 = arith.constant 0 : i32
    %c0_i32_1 = arith.constant 0 : i32
    return %c0_i32, %c0_i32_0 : i32, i32
  }
  func.func @transform_6(%arg0: i32) -> (i32, i32) {
    %c0_i32 = arith.constant 0 : i32
    %c0_i32_0 = arith.constant 0 : i32
    %c0_i32_1 = arith.constant 0 : i32
    return %c0_i32, %c0_i32_0 : i32, i32
  }
  func.func @transform_7(%arg0: i32) -> (i32, i32) {
    %c0_i32 = arith.constant 0 : i32
    %c0_i32_0 = arith.constant 0 : i32
    return %arg0, %c0_i32 : i32, i32
  }
}

</mosaic_0001>

<llo_original>
// kernel: tpu_custom_call.1
$region0: #{tpu_custom_call.1}
  #allocation0 [shape = 'u32[]', space=smem, size = 0x4, offset = 0x4, fixed_abs, tag = 'smem constant byte address 0x4 - core index']
  #allocation1 [shape = 'u32[72,128]{1,0:T(1,128)}', space=vmem, size = 0x9000, scoped, tag = 'internal scratch']
  %s0 = inlined_call_operand.hbm [shape: f32[8,400], index: 0, kind: input, shape index: {}]
  %s1 = inlined_call_operand.hbm [shape: f32[400,128], index: 1, kind: input, shape index: {}]
  %s2 = inlined_call_operand.vmem [shape: f32[1,128], index: 2, kind: input, shape index: {}]
  %s3 = inlined_call_operand.hbm [shape: f32[1,128,128], index: 3, kind: input, shape index: {}]
  %s4 = inlined_call_operand.vmem [shape: f32[1,1,128], index: 4, kind: input, shape index: {}]
  %s5 = inlined_call_operand.hbm [shape: f32[128,128], index: 5, kind: input, shape index: {}]
  %s6 = inlined_call_operand.vmem [shape: f32[1,128], index: 6, kind: input, shape index: {}]
  %s7 = inlined_call_operand.hbm [shape: f32[8,128], index: 7, kind: output, shape index: {}]
  %s8 = sld [smem:[#allocation0]]
  $region54: #{tpu_custom_call.1} parent=0
    _
  %s10 = ssub.s32 1, %s8
  %s11 = scalar_select 0, %s10, %s8
  $region1: #{tpu_custom_call.1} parent=0
    #allocation2 [shape = 'u8[16384]{0}', space=vmem, size = 0x4000, scoped, tag = 'input window, operand 0, single buffered']
    #allocation3 [shape = 's32[1]{0}', space=sflag, size = 0x4, scoped, tag = 'scoped memory for tpu_custom_call.1']
    #allocation4 [shape = 's32[1]{0}', space=sflag, size = 0x4, scoped, tag = 'scoped memory for tpu_custom_call.1']
    #allocation5 [shape = 'u8[204800]{0}', space=vmem, size = 0x32000, scoped, tag = 'input window, operand 1, single buffered']
    #allocation6 [shape = 's32[1]{0}', space=sflag, size = 0x4, scoped, tag = 'scoped memory for tpu_custom_call.1']
    #allocation7 [shape = 'u8[65536]{0}', space=vmem, size = 0x10000, scoped, tag = 'input window, operand 3, single buffered']
    #allocation8 [shape = 'u8[65536]{0}', space=vmem, size = 0x10000, scoped, tag = 'input window, operand 5, single buffered']
    #allocation9 [shape = 's32[1]{0}', space=sflag, size = 0x4, scoped, tag = 'scoped memory for tpu_custom_call.1']
    #allocation10 [shape = 'u8[4096]{0}', space=vmem, size = 0x1000, scoped, tag = 'output window, operand 0, single buffered']
    %12 = vsyncpa [#allocation3], 0
    %13 = vsyncpa [#allocation6], 0
    %14 = vsyncpa [#allocation9], 0
    %15 = vsyncpa [#allocation4], 0
    // Predicated region
    $region2: #{tpu_custom_call.1} parent=1 // pred_check
      _
    $region3: #{tpu_custom_call.1} parent=1 // pred_check_branch
      %17 = sbr.rel (0) target = $region5
    $region4: #{tpu_custom_call.1} parent=1 // pred_region
      %19 = vsyncadd [#allocation3], 0
      %s21 = sshll.u32 %s0, 4
      %s22 = int_to_ptr.hbm [resolvable:$true] %s21
      %s23 = sshll.u32 [#allocation2], 4
      %s24 = int_to_ptr.vmem [resolvable:$true] %s23
      %26 = dma.hbm_to_vmem [thread:$0]  %s22, 512, %s24, [#allocation3]
    $region5: #{tpu_custom_call.1} parent=1 // pred_fallthru
      _
    // Predicated region
    $region6: #{tpu_custom_call.1} parent=1 // pred_check
      _
    $region7: #{tpu_custom_call.1} parent=1 // pred_check_branch
      %28 = sbr.rel (0) target = $region9
    $region8: #{tpu_custom_call.1} parent=1 // pred_region
      %30 = vsyncadd [#allocation6], 0
      %s31 = sshll.u32 %s1, 4
      %s32 = int_to_ptr.hbm [resolvable:$true] %s31
      %s33 = sshll.u32 [#allocation5], 4
      %s34 = int_to_ptr.vmem [resolvable:$true] %s33
      %39 = dma.hbm_to_vmem [thread:$0]  %s32, 6400, %s34, [#allocation6], 128, 128, 8
    $region9: #{tpu_custom_call.1} parent=1 // pred_fallthru
      _
    // Predicated region
    $region10: #{tpu_custom_call.1} parent=1 // pred_check
      _
    $region11: #{tpu_custom_call.1} parent=1 // pred_check_branch
      %41 = sbr.rel (0) target = $region13
    $region12: #{tpu_custom_call.1} parent=1 // pred_region
      _
    $region13: #{tpu_custom_call.1} parent=1 // pred_fallthru
      _
    // Predicated region
    $region14: #{tpu_custom_call.1} parent=1 // pred_check
      _
    $region15: #{tpu_custom_call.1} parent=1 // pred_check_branch
      %43 = sbr.rel (0) target = $region17
    $region16: #{tpu_custom_call.1} parent=1 // pred_region
      %45 = vsyncadd [#allocation6], 0
      %s46 = sshll.u32 %s3, 4
      %s47 = int_to_ptr.hbm [resolvable:$true] %s46
      %s48 = sshll.u32 [#allocation7], 4
      %s49 = int_to_ptr.vmem [resolvable:$true] %s48
      %54 = dma.hbm_to_vmem [thread:$0]  %s47, 2048, %s49, [#allocation6], 128, 128, 8
    $region17: #{tpu_custom_call.1} parent=1 // pred_fallthru
      _
    // Predicated region
    $region18: #{tpu_custom_call.1} parent=1 // pred_check
      _
    $region19: #{tpu_custom_call.1} parent=1 // pred_check_branch
      %56 = sbr.rel (0) target = $region21
    $region20: #{tpu_custom_call.1} parent=1 // pred_region
      _
    $region21: #{tpu_custom_call.1} parent=1 // pred_fallthru
      _
    // Predicated region
    $region22: #{tpu_custom_call.1} parent=1 // pred_check
      _
    $region23: #{tpu_custom_call.1} parent=1 // pred_check_branch
      %58 = sbr.rel (0) target = $region25
    $region24: #{tpu_custom_call.1} parent=1 // pred_region
      %60 = vsyncadd [#allocation9], 0
      %s61 = sshll.u32 %s5, 4
      %s62 = int_to_ptr.hbm [resolvable:$true] %s61
      %s63 = sshll.u32 [#allocation8], 4
      %s64 = int_to_ptr.vmem [resolvable:$true] %s63
      %69 = dma.hbm_to_vmem [thread:$0]  %s62, 2048, %s64, [#allocation9], 128, 128, 8
    $region25: #{tpu_custom_call.1} parent=1 // pred_fallthru
      _
    // Predicated region
    $region26: #{tpu_custom_call.1} parent=1 // pred_check
      _
    $region27: #{tpu_custom_call.1} parent=1 // pred_check_branch
      %71 = sbr.rel (0) target = $region29
    $region28: #{tpu_custom_call.1} parent=1 // pred_region
      _
    $region29: #{tpu_custom_call.1} parent=1 // pred_fallthru
      _
    // Predicated region
    $region30: #{tpu_custom_call.1} parent=1 // pred_check
      _
    $region31: #{tpu_custom_call.1} parent=1 // pred_check_branch
      %73 = sbr.rel (0) target = $region33
    $region32: #{tpu_custom_call.1} parent=1 // pred_region
      %75 = dma.done [#allocation3], 512
    $region33: #{tpu_custom_call.1} parent=1 // pred_fallthru
      _
    // Predicated region
    $region34: #{tpu_custom_call.1} parent=1 // pred_check
      _
    $region35: #{tpu_custom_call.1} parent=1 // pred_check_branch
      %77 = sbr.rel (0) target = $region37
    $region36: #{tpu_custom_call.1} parent=1 // pred_region
      %79 = dma.done [#allocation6], 6400
    $region37: #{tpu_custom_call.1} parent=1 // pred_fallthru
      _
    // Predicated region
    $region38: #{tpu_custom_call.1} parent=1 // pred_check
      _
    $region39: #{tpu_custom_call.1} parent=1 // pred_check_branch
      %81 = sbr.rel (0) target = $region41
    $region40: #{tpu_custom_call.1} parent=1 // pred_region
      %83 = dma.done [#allocation6], 2048
    $region41: #{tpu_custom_call.1} parent=1 // pred_fallthru
      _
    // Predicated region
    $region42: #{tpu_custom_call.1} parent=1 // pred_check
      _
    $region43: #{tpu_custom_call.1} parent=1 // pred_check_branch
      %85 = sbr.rel (0) target = $region45
    $region44: #{tpu_custom_call.1} parent=1 // pred_region
      %87 = dma.done [#allocation9], 2048
    $region45: #{tpu_custom_call.1} parent=1 // pred_fallthru
      _
    %v88 = vld [vmem:[#allocation2] sm:$0xff]
    %v89 = vld [vmem:[#allocation2 + $0x8] sm:$0xff]
    %v90 = vld [vmem:[#allocation2 + $0x10] sm:$0xff]
    %v91 = vld [vmem:[#allocation2 + $0x18] sm:$0xff]
    %v92 = vld [vmem:[#allocation5] sm:$0xff]
    %v93 = vld [vmem:[#allocation5 + $0x8] sm:$0xff]
    %v94 = vld [vmem:[#allocation5 + $0x10] sm:$0xff]
    %v95 = vld [vmem:[#allocation5 + $0x18] sm:$0xff]
    %v96 = vld [vmem:[#allocation5 + $0x20] sm:$0xff]
    %v97 = vld [vmem:[#allocation5 + $0x28] sm:$0xff]
    %v98 = vld [vmem:[#allocation5 + $0x30] sm:$0xff]
    %v99 = vld [vmem:[#allocation5 + $0x38] sm:$0xff]
    %v100 = vld [vmem:[#allocation5 + $0x40] sm:$0xff]
    %v101 = vld [vmem:[#allocation5 + $0x48] sm:$0xff]
    %v102 = vld [vmem:[#allocation5 + $0x50] sm:$0xff]
    %v103 = vld [vmem:[#allocation5 + $0x58] sm:$0xff]
    %v104 = vld [vmem:[#allocation5 + $0x60] sm:$0xff]
    %v105 = vld [vmem:[#allocation5 + $0x68] sm:$0xff]
    %v106 = vld [vmem:[#allocation5 + $0x70] sm:$0xff]
    %v107 = vld [vmem:[#allocation5 + $0x78] sm:$0xff]
    %v108 = vld [vmem:[#allocation5 + $0x80] sm:$0xff]
    %v109 = vld [vmem:[#allocation5 + $0x88] sm:$0xff]
    %v110 = vld [vmem:[#allocation5 + $0x90] sm:$0xff]
    %v111 = vld [vmem:[#allocation5 + $0x98] sm:$0xff]
    %v112 = vld [vmem:[#allocation5 + $0xa0] sm:$0xff]
    %v113 = vld [vmem:[#allocation5 + $0xa8] sm:$0xff]
    %v114 = vld [vmem:[#allocation5 + $0xb0] sm:$0xff]
    %v115 = vld [vmem:[#allocation5 + $0xb8] sm:$0xff]
    %v116 = vld [vmem:[#allocation5 + $0xc0] sm:$0xff]
    %v117 = vld [vmem:[#allocation5 + $0xc8] sm:$0xff]
    %v118 = vld [vmem:[#allocation5 + $0xd0] sm:$0xff]
    %v119 = vld [vmem:[#allocation5 + $0xd8] sm:$0xff]
    %v120 = vld [vmem:[#allocation5 + $0xe0] sm:$0xff]
    %v121 = vld [vmem:[#allocation5 + $0xe8] sm:$0xff]
    %v122 = vld [vmem:[#allocation5 + $0xf0] sm:$0xff]
    %v123 = vld [vmem:[#allocation5 + $0xf8] sm:$0xff]
    %v124 = vld [vmem:[#allocation5 + $0x100] sm:$0xff]
    %v125 = vld [vmem:[#allocation5 + $0x108] sm:$0xff]
    %v126 = vld [vmem:[#allocation5 + $0x110] sm:$0xff]
    %v127 = vld [vmem:[#allocation5 + $0x118] sm:$0xff]
    %v128 = vld [vmem:[#allocation5 + $0x120] sm:$0xff]
    %v129 = vld [vmem:[#allocation5 + $0x128] sm:$0xff]
    %v130 = vld [vmem:[#allocation5 + $0x130] sm:$0xff]
    %v131 = vld [vmem:[#allocation5 + $0x138] sm:$0xff]
    %v132 = vld [vmem:[#allocation5 + $0x140] sm:$0xff]
    %v133 = vld [vmem:[#allocation5 + $0x148] sm:$0xff]
    %v134 = vld [vmem:[#allocation5 + $0x150] sm:$0xff]
    %v135 = vld [vmem:[#allocation5 + $0x158] sm:$0xff]
    %v136 = vld [vmem:[#allocation5 + $0x160] sm:$0xff]
    %v137 = vld [vmem:[#allocation5 + $0x168] sm:$0xff]
    %v138 = vld [vmem:[#allocation5 + $0x170] sm:$0xff]
    %v139 = vld [vmem:[#allocation5 + $0x178] sm:$0xff]
    %v140 = vld [vmem:[#allocation5 + $0x180] sm:$0xff]
    %v141 = vld [vmem:[#allocation5 + $0x188] sm:$0xff]
    %v142 = vld [vmem:[%s2] sm:$0x1]
    %v144 = vperm.slane %v142, 0
    %vm146 = vcmask 130048
    %v148 = vsel %vm146, %v91, 0
    %150 = vmatpush.msra.mxu0 %v107
    %151 = vmatpush.msra.mxu0 %v106
    %152 = vmatpush.msra.mxu0 %v105
    %153 = vmatpush.msra.mxu0 %v104
    %154 = vmatpush.msra.mxu0 %v103
    %155 = vmatpush.msra.mxu0 %v102
    %156 = vmatpush.msra.mxu0 %v101
    %157 = vmatpush.msra.mxu0 %v100
    %158 = vmatpush.msra.mxu0 %v99
    %159 = vmatpush.msra.mxu0 %v98
    %160 = vmatpush.msra.mxu0 %v97
    %161 = vmatpush.msra.mxu0 %v96
    %162 = vmatpush.msra.mxu0 %v95
    %163 = vmatpush.msra.mxu0 %v94
    %164 = vmatpush.msra.mxu0 %v93
    %165 = vmatpush.msra.mxu0 %v92
    %166 = vmatmul.f32.gmra.mxu0 %v88
    %v167 = vpop.f32.mrf.mxu0
    %v168 = vadd.f32 %v144, %v167
    %169 = vdwg.mxu0
    %170 = vmatpush.msra.mxu0 %v123
    %171 = vmatpush.msra.mxu0 %v122
    %172 = vmatpush.msra.mxu0 %v121
    %173 = vmatpush.msra.mxu0 %v120
    %174 = vmatpush.msra.mxu0 %v119
    %175 = vmatpush.msra.mxu0 %v118
    %176 = vmatpush.msra.mxu0 %v117
    %177 = vmatpush.msra.mxu0 %v116
    %178 = vmatpush.msra.mxu0 %v115
    %179 = vmatpush.msra.mxu0 %v114
    %180 = vmatpush.msra.mxu0 %v113
    %181 = vmatpush.msra.mxu0 %v112
    %182 = vmatpush.msra.mxu0 %v111
    %183 = vmatpush.msra.mxu0 %v110
    %184 = vmatpush.msra.mxu0 %v109
    %185 = vmatpush.msra.mxu0 %v108
    %186 = vmatmul.f32.gmra.mxu0 %v89
    %v187 = vpop.f32.mrf.mxu0
    %v188 = vadd.f32 %v168, %v187
    %189 = vdwg.mxu0
    %190 = vmatpush.msra.mxu0 %v139
    %191 = vmatpush.msra.mxu0 %v138
    %192 = vmatpush.msra.mxu0 %v137
    %193 = vmatpush.msra.mxu0 %v136
    %194 = vmatpush.msra.mxu0 %v135
    %195 = vmatpush.msra.mxu0 %v134
    %196 = vmatpush.msra.mxu0 %v133
    %197 = vmatpush.msra.mxu0 %v132
    %198 = vmatpush.msra.mxu0 %v131
    %199 = vmatpush.msra.mxu0 %v130
    %200 = vmatpush.msra.mxu0 %v129
    %201 = vmatpush.msra.mxu0 %v128
    %202 = vmatpush.msra.mxu0 %v127
    %203 = vmatpush.msra.mxu0 %v126
    %204 = vmatpush.msra.mxu0 %v125
    %205 = vmatpush.msra.mxu0 %v124
    %206 = vmatmul.f32.gmra.mxu0 %v90
    %v207 = vpop.f32.mrf.mxu0
    %v208 = vadd.f32 %v188, %v207
    %209 = vdwg.mxu0
    %210 = vmatpush.msra.mxu0 0.0
    %211 = vmatpush.msra.mxu0 0.0
    %212 = vmatpush.msra.mxu0 0.0
    %213 = vmatpush.msra.mxu0 0.0
    %214 = vmatpush.msra.mxu0 0.0
    %215 = vmatpush.msra.mxu0 0.0
    %216 = vmatpush.msra.mxu0 0.0
    %217 = vmatpush.msra.mxu0 0.0
    %218 = vmatpush.msra.mxu0 0.0
    %219 = vmatpush.msra.mxu0 0.0
    %220 = vmatpush.msra.mxu0 0.0
    %221 = vmatpush.msra.mxu0 0.0
    %222 = vmatpush.msra.mxu0 0.0
    %223 = vmatpush.msra.mxu0 0.0
    %224 = vmatpush.msra.mxu0 %v141
    %225 = vmatpush.msra.mxu0 %v140
    %226 = vmatmul.f32.gmra.mxu0 %v148
    %v227 = vpop.f32.mrf.mxu0
    %v228 = vadd.f32 %v208, %v227
    %229 = vdwg.mxu0
    %v230 = vmax.f32 %v228, 0.0
    %v231 = vld [vmem:[#allocation7] sm:$0xff]
    %v232 = vld [vmem:[#allocation7 + $0x8] sm:$0xff]
    %v233 = vld [vmem:[#allocation7 + $0x10] sm:$0xff]
    %v234 = vld [vmem:[#allocation7 + $0x18] sm:$0xff]
    %v235 = vld [vmem:[#allocation7 + $0x20] sm:$0xff]
    %v236 = vld [vmem:[#allocation7 + $0x28] sm:$0xff]
    %v237 = vld [vmem:[#allocation7 + $0x30] sm:$0xff]
    %v238 = vld [vmem:[#allocation7 + $0x38] sm:$0xff]
    %v239 = vld [vmem:[#allocation7 + $0x40] sm:$0xff]
    %v240 = vld [vmem:[#allocation7 + $0x48] sm:$0xff]
    %v241 = vld [vmem:[#allocation7 + $0x50] sm:$0xff]
    %v242 = vld [vmem:[#allocation7 + $0x58] sm:$0xff]
    %v243 = vld [vmem:[#allocation7 + $0x60] sm:$0xff]
    %v244 = vld [vmem:[#allocation7 + $0x68] sm:$0xff]
    %v245 = vld [vmem:[#allocation7 + $0x70] sm:$0xff]
    %v246 = vld [vmem:[#allocation7 + $0x78] sm:$0xff]
    %v247 = vld [vmem:[%s4] sm:$0x1]
    %v249 = vperm.slane %v247, 0
    %251 = vmatpush.msra.mxu0 %v246
    %252 = vmatpush.msra.mxu0 %v245
    %253 = vmatpush.msra.mxu0 %v244
    %254 = vmatpush.msra.mxu0 %v243
    %255 = vmatpush.msra.mxu0 %v242
    %256 = vmatpush.msra.mxu0 %v241
    %257 = vmatpush.msra.mxu0 %v240
    %258 = vmatpush.msra.mxu0 %v239
    %259 = vmatpush.msra.mxu0 %v238
    %260 = vmatpush.msra.mxu0 %v237
    %261 = vmatpush.msra.mxu0 %v236
    %262 = vmatpush.msra.mxu0 %v235
    %263 = vmatpush.msra.mxu0 %v234
    %264 = vmatpush.msra.mxu0 %v233
    %265 = vmatpush.msra.mxu0 %v232
    %266 = vmatpush.msra.mxu0 %v231
    %267 = vmatmul.f32.gmra.mxu0 %v230
    %v268 = vpop.f32.mrf.mxu0
    %v269 = vadd.f32 %v249, %v268
    %270 = vdwg.mxu0
    %v271 = vmax.f32 %v269, 0.0
    %v272 = vld [vmem:[#allocation8] sm:$0xff]
    %v273 = vld [vmem:[#allocation8 + $0x8] sm:$0xff]
    %v274 = vld [vmem:[#allocation8 + $0x10] sm:$0xff]
    %v275 = vld [vmem:[#allocation8 + $0x18] sm:$0xff]
    %v276 = vld [vmem:[#allocation8 + $0x20] sm:$0xff]
    %v277 = vld [vmem:[#allocation8 + $0x28] sm:$0xff]
    %v278 = vld [vmem:[#allocation8 + $0x30] sm:$0xff]
    %v279 = vld [vmem:[#allocation8 + $0x38] sm:$0xff]
    %v280 = vld [vmem:[#allocation8 + $0x40] sm:$0xff]
    %v281 = vld [vmem:[#allocation8 + $0x48] sm:$0xff]
    %v282 = vld [vmem:[#allocation8 + $0x50] sm:$0xff]
    %v283 = vld [vmem:[#allocation8 + $0x58] sm:$0xff]
    %v284 = vld [vmem:[#allocation8 + $0x60] sm:$0xff]
    %v285 = vld [vmem:[#allocation8 + $0x68] sm:$0xff]
    %v286 = vld [vmem:[#allocation8 + $0x70] sm:$0xff]
    %v287 = vld [vmem:[#allocation8 + $0x78] sm:$0xff]
    %v288 = vld [vmem:[%s6] sm:$0x1]
    %v290 = vperm.slane %v288, 0
    %292 = vmatpush.msra.mxu0 %v287
    %293 = vmatpush.msra.mxu0 %v286
    %294 = vmatpush.msra.mxu0 %v285
    %295 = vmatpush.msra.mxu0 %v284
    %296 = vmatpush.msra.mxu0 %v283
    %297 = vmatpush.msra.mxu0 %v282
    %298 = vmatpush.msra.mxu0 %v281
    %299 = vmatpush.msra.mxu0 %v280
    %300 = vmatpush.msra.mxu0 %v279
    %301 = vmatpush.msra.mxu0 %v278
    %302 = vmatpush.msra.mxu0 %v277
    %303 = vmatpush.msra.mxu0 %v276
    %304 = vmatpush.msra.mxu0 %v275
    %305 = vmatpush.msra.mxu0 %v274
    %306 = vmatpush.msra.mxu0 %v273
    %307 = vmatpush.msra.mxu0 %v272
    %308 = vmatmul.f32.gmra.mxu0 %v271
    %v309 = vpop.f32.mrf.mxu0
    %v310 = vadd.f32 %v290, %v309
    %311 = vdwg.mxu0
    %312 = vst [vmem:[#allocation10] sm:$0xff] %v310
    // Predicated region
    $region46: #{tpu_custom_call.1} parent=1 // pred_check
      _
    $region47: #{tpu_custom_call.1} parent=1 // pred_check_branch
      %314 = sbr.rel (0) target = $region49
    $region48: #{tpu_custom_call.1} parent=1 // pred_region
      %316 = vsyncadd [#allocation4], 0
      %s318 = sshll.u32 [#allocation10], 4
      %s319 = int_to_ptr.vmem [resolvable:$true] %s318
      %s320 = sshll.u32 %s7, 4
      %s321 = int_to_ptr.hbm [resolvable:$true] %s320
      %323 = dma.vmem_to_hbm [thread:$0]  %s319, 128, %s321, [#allocation4]
    $region49: #{tpu_custom_call.1} parent=1 // pred_fallthru
      _
    // Predicated region
    $region50: #{tpu_custom_call.1} parent=1 // pred_check
      _
    $region51: #{tpu_custom_call.1} parent=1 // pred_check_branch
      %325 = sbr.rel (0) target = $region53
    $region52: #{tpu_custom_call.1} parent=1 // pred_region
      %327 = dma.done [#allocation4], 128
    $region53: #{tpu_custom_call.1} parent=1 // pred_fallthru
      _
    %328 = vsyncpa [#allocation3], 1
    %329 = vsyncpa [#allocation6], 1
    %330 = vsyncpa [#allocation9], 1
    %331 = vsyncpa [#allocation4], 1

</llo_original>
